<compile_context>
chip_gen: v5e
topology: v5e:2x2
jax: 0.10.0
libtpu: 0.0.40
codegen_flags: <defaults>
</compile_context>

<pallas_src>
import functools

import jax
import jax.numpy as jnp
from jax.experimental import pallas as pl
from jax.experimental.pallas import tpu as pltpu


def _rcnn_loss_kernel(cls_ref, reg_ref, tgt_ref, lbl_ref, out_ref,
                      ce_acc, loc_acc, fg_acc, *, n_true, tn, inv_n, lam):
    j = pl.program_id(0)

    # Zero the resident accumulators at the start of the reduction.
    @pl.when(j == 0)
    def _():
        ce_acc[...] = jnp.zeros_like(ce_acc)
        loc_acc[...] = jnp.zeros_like(loc_acc)
        fg_acc[...] = jnp.zeros_like(fg_acc)

    # Validity mask for the (possibly ragged) tail block: columns >= N hold
    # unspecified data, so every contribution below is select-masked (NaNs in
    # the dead branch of a select do not propagate).
    col = jax.lax.broadcasted_iota(jnp.int32, (1, tn), 1)            # [1, TN]
    valid = (j * tn + col) < n_true                                  # [1, TN]

    lbl = lbl_ref[...]                                               # [1, TN] i32

    # ---- classification: cross-entropy; softmax over the sublane (class) axis
    cls = cls_ref[...].astype(jnp.float32)                           # [C, TN]
    m = jnp.max(cls, axis=0, keepdims=True)                          # [1, TN]
    z = cls - m
    lse = jnp.log(jnp.sum(jnp.exp(z), axis=0, keepdims=True))        # [1, TN]
    row = jax.lax.broadcasted_iota(jnp.int32, cls.shape, 0)          # [C, TN]
    z_lbl = jnp.sum(jnp.where(row == lbl, z, 0.0), axis=0, keepdims=True)
    ce_acc[...] += jnp.where(valid, lse - z_lbl, 0.0)

    # ---- localization: smooth-L1 norm over box coords, foreground RoIs only
    diff = reg_ref[...].astype(jnp.float32) - tgt_ref[...].astype(jnp.float32)
    a = jnp.abs(diff)
    sl1 = jnp.where(a < 1.0, 0.5 * diff * diff, a - 0.5)
    norms = jnp.sum(sl1, axis=0, keepdims=True)                      # [1, TN]
    fg = jnp.logical_and(lbl != 0, valid)                            # [1, TN]
    loc_acc[...] += jnp.where(fg, norms, 0.0)
    fg_acc[...] += fg.astype(jnp.float32)

    # ---- finalize in-kernel: lane reductions (XLU is idle) + scalar combine.
    @pl.when(j == pl.num_programs(0) - 1)
    def _():
        ce_sum = jnp.sum(ce_acc[...], axis=1, keepdims=True)         # [1, 1]
        loc_sum = jnp.sum(loc_acc[...], axis=1, keepdims=True)       # [1, 1]
        fg_sum = jnp.sum(fg_acc[...], axis=1, keepdims=True)         # [1, 1]
        # 0/0 -> NaN intentionally matches torch's mean over an empty set.
        out_ref[...] = ce_sum * inv_n + lam * (loc_sum / fg_sum)


def _pick_lane_tile(n, c, r, in_bytes_per_col):
    """Largest 128-multiple lane tile (<= 8192) whose double-buffered inputs
    plus f32 intermediates stay far inside every chip's scoped-VMEM default
    (v5e's 16 MiB is the floor), without over-padding small N."""
    tn = 8192
    c_pad = -(-max(c, 1) // 8) * 8
    r_pad = -(-max(r, 1) // 8) * 8
    # Rough per-column VMEM footprint: 2x-buffered input blocks + a handful of
    # live f32 temporaries of sublane-padded height.
    vmem_per_col = 2 * in_bytes_per_col + 4 * (4 * c_pad + 3 * r_pad + 16)
    while tn > 128 and tn * vmem_per_col > (12 << 20):
        tn //= 2
    needed = -(-n // 128) * 128          # smallest lane-aligned cover of N
    return max(128, min(tn, needed))


def rcnn_loss(class_scores, regression_scores, target_regression_scores,
              labels, lambda_=1.0):
    """class_scores: [N, C]; regression/target: [N, R]; labels: [N] int."""
    n, c = class_scores.shape
    r = regression_scores.shape[1]

    # Lane-dense layouts: RoIs on the 128-lane axis, classes / box coords on
    # sublanes. Pure layout plumbing; native dtypes pass straight through
    # (bf16 would halve HBM traffic, the kernel upcasts to f32 for the math).
    # TODO(synk): have the upstream FC emit [C, N] / [R, N] directly (swap the
    # dot operands / transpose the weight) so these relayout passes disappear.
    cls_t = class_scores.T                                   # [C, N]
    reg_t = regression_scores.T                              # [R, N]
    tgt_t = target_regression_scores.T                       # [R, N]
    lbl = labels.astype(jnp.int32).reshape(1, n)             # [1, N]

    in_bytes_per_col = (c * class_scores.dtype.itemsize
                        + 2 * r * regression_scores.dtype.itemsize + 4)
    tn = _pick_lane_tile(n, c, r, in_bytes_per_col)
    n_tiles = pl.cdiv(n, tn)

    kernel = functools.partial(_rcnn_loss_kernel, n_true=n, tn=tn,
                               inv_n=1.0 / n, lam=float(lambda_))
    in_map = lambda j: (0, j)

    out = pl.pallas_call(
        kernel,
        out_shape=jax.ShapeDtypeStruct((1, 1), jnp.float32),
        grid=(n_tiles,),
        in_specs=[
            pl.BlockSpec((c, tn), in_map),
            pl.BlockSpec((r, tn), in_map),
            pl.BlockSpec((r, tn), in_map),
            pl.BlockSpec((1, tn), in_map),
        ],
        out_specs=pl.BlockSpec((1, 1), lambda j: (0, 0)),
        scratch_shapes=[pltpu.VMEM((1, tn), jnp.float32)] * 3,
        compiler_params=pltpu.CompilerParams(
            dimension_semantics=("arbitrary",)),
    )(cls_t, reg_t, tgt_t, lbl)
    return out[0, 0]


def _reference_rcnn_loss(class_scores, regression_scores,
                         target_regression_scores, labels, lambda_=1.0):
    # Pure-JAX reference mirroring the PyTorch module.
    logp = jax.nn.log_softmax(class_scores.astype(jnp.float32), axis=-1)
    ce = -jnp.take_along_axis(logp, labels[:, None].astype(jnp.int32), axis=-1)
    cls_loss = jnp.mean(ce)
    diff = (regression_scores - target_regression_scores).astype(jnp.float32)
    sl1 = jnp.where(jnp.abs(diff) < 1, 0.5 * diff ** 2, jnp.abs(diff) - 0.5)
    norms = jnp.sum(sl1, axis=-1)
    fg = (labels != 0).astype(jnp.float32)
    loc_loss = jnp.sum(norms * fg) / jnp.sum(fg)
    return cls_loss + lambda_ * loc_loss


if __name__ == "__main__":
    key = jax.random.PRNGKey(0)
    k1, k2, k3, k4 = jax.random.split(key, 4)

    # Small shapes consistent with the module: 8 RoIs, 5 classes (0 = bg), 4 coords.
    N, C, R = 8, 5, 4
    class_scores = jax.random.normal(k1, (N, C), dtype=jnp.float32)
    regression_scores = jax.random.normal(k2, (N, R), dtype=jnp.float32)
    target_regression_scores = jax.random.normal(k3, (N, R), dtype=jnp.float32)
    labels = jax.random.randint(k4, (N,), 0, C, dtype=jnp.int32)
    labels = labels.at[0].set(1)  # at least one foreground RoI

    loss = rcnn_loss(class_scores, regression_scores,
                     target_regression_scores, labels, lambda_=1.0)
    jax.block_until_ready(loss)
    ref = _reference_rcnn_loss(class_scores, regression_scores,
                               target_regression_scores, labels, lambda_=1.0)
    assert jnp.allclose(loss, ref, rtol=1e-5, atol=1e-5), (loss, ref)

    # Larger case: multi-tile grid + ragged (non-128-multiple) tail block,
    # exercising the in-kernel masking of the unspecified padded columns.
    N2, C2 = 9479, 7
    k5, k6, k7, k8 = jax.random.split(jax.random.PRNGKey(1), 4)
    cs2 = jax.random.normal(k5, (N2, C2), dtype=jnp.float32)
    rs2 = jax.random.normal(k6, (N2, R), dtype=jnp.float32)
    ts2 = jax.random.normal(k7, (N2, R), dtype=jnp.float32)
    lb2 = jax.random.randint(k8, (N2,), 0, C2, dtype=jnp.int32).at[0].set(1)

    loss2 = rcnn_loss(cs2, rs2, ts2, lb2, lambda_=0.5)
    jax.block_until_ready(loss2)
    ref2 = _reference_rcnn_loss(cs2, rs2, ts2, lb2, lambda_=0.5)
    assert jnp.allclose(loss2, ref2, rtol=1e-4, atol=1e-5), (loss2, ref2)

    print("KERNEL_OK")
</pallas_src>

<mosaic_0001>
module attributes {stable_mosaic.version = 11 : i64} {
  func.func @_rcnn_loss_kernel(%arg0: i32, %arg1: memref<5x128xf32, #tpu.memory_space<vmem>>, %arg2: memref<4x128xf32, #tpu.memory_space<vmem>>, %arg3: memref<4x128xf32, #tpu.memory_space<vmem>>, %arg4: memref<1x128xi32, #tpu.memory_space<vmem>>, %arg5: memref<1x1xf32, #tpu.memory_space<vmem>>, %arg6: memref<1x128xf32, #tpu.memory_space<vmem>>, %arg7: memref<1x128xf32, #tpu.memory_space<vmem>>, %arg8: memref<1x128xf32, #tpu.memory_space<vmem>>) attributes {dimension_semantics = [#tpu.dimension_semantics<arbitrary>], iteration_bounds = array<i64: 1>, scalar_prefetch = 0 : i64, scratch_operands = 3 : i64, tpu.core_type = #tpu.core_type<tc>, window_params = [{transform_indices = @transform_0, window_bounds = array<i64: 5, 128>}, {transform_indices = @transform_1, window_bounds = array<i64: 4, 128>}, {transform_indices = @transform_2, window_bounds = array<i64: 4, 128>}, {transform_indices = @transform_3, window_bounds = array<i64: 1, 128>}, {pipeline_mode = #tpu.pipeline_mode<synchronous>, transform_indices = @transform_4, window_bounds = array<i64: 1, 1>}]} {
    %c0_i32 = arith.constant 0 : i32
    %0 = arith.cmpi eq, %arg0, %c0_i32 : i32
    %1 = arith.extui %0 : i1 to i32
    %c0_i32_0 = arith.constant 0 : i32
    %2 = arith.cmpi ne, %1, %c0_i32_0 : i32
    scf.if %2 {
      %cst_32 = arith.constant 0.000000e+00 : f32
      %62 = vector.broadcast %cst_32 : f32 to vector<1x128xf32>
      %c0_33 = arith.constant 0 : index
      %c0_34 = arith.constant 0 : index
      %63 = vector.load %arg6[%c0_33, %c0_34] : memref<1x128xf32, #tpu.memory_space<vmem>>, vector<1x128xf32>
      tpu.vector_store %arg6[%c0_33, %c0_34], %62 {strides = array<i32>} : memref<1x128xf32, #tpu.memory_space<vmem>>, vector<1x128xf32>,
      %cst_35 = arith.constant 0.000000e+00 : f32
      %64 = vector.broadcast %cst_35 : f32 to vector<1x128xf32>
      %c0_36 = arith.constant 0 : index
      %c0_37 = arith.constant 0 : index
      %65 = vector.load %arg7[%c0_36, %c0_37] : memref<1x128xf32, #tpu.memory_space<vmem>>, vector<1x128xf32>
      tpu.vector_store %arg7[%c0_36, %c0_37], %64 {strides = array<i32>} : memref<1x128xf32, #tpu.memory_space<vmem>>, vector<1x128xf32>,
      %cst_38 = arith.constant 0.000000e+00 : f32
      %66 = vector.broadcast %cst_38 : f32 to vector<1x128xf32>
      %c0_39 = arith.constant 0 : index
      %c0_40 = arith.constant 0 : index
      %67 = vector.load %arg8[%c0_39, %c0_40] : memref<1x128xf32, #tpu.memory_space<vmem>>, vector<1x128xf32>
      tpu.vector_store %arg8[%c0_39, %c0_40], %66 {strides = array<i32>} : memref<1x128xf32, #tpu.memory_space<vmem>>, vector<1x128xf32>,
    } else {
    }
    %3 = tpu.iota {dimensions = array<i32: 1>} : vector<1x128xi32>
    %c128_i32 = arith.constant 128 : i32
    %4 = arith.muli %arg0, %c128_i32 : i32
    %5 = vector.broadcast %4 : i32 to vector<1x128xi32>
    %6 = arith.addi %5, %3 : vector<1x128xi32>
    %c8_i32 = arith.constant 8 : i32
    %7 = vector.broadcast %c8_i32 : i32 to vector<1x128xi32>
    %8 = arith.cmpi slt, %6, %7 : vector<1x128xi32>
    %c0 = arith.constant 0 : index
    %c0_1 = arith.constant 0 : index
    %9 = vector.load %arg4[%c0, %c0_1] : memref<1x128xi32, #tpu.memory_space<vmem>>, vector<1x128xi32>
    %c0_2 = arith.constant 0 : index
    %c0_3 = arith.constant 0 : index
    %10 = vector.load %arg1[%c0_2, %c0_3] : memref<5x128xf32, #tpu.memory_space<vmem>>, vector<5x128xf32>
    %cst = arith.constant dense<0xFF800000> : vector<128xf32>
    %11 = vector.multi_reduction <maximumf>, %10, %cst [0] : vector<5x128xf32> to vector<128xf32>
    %12 = vector.shape_cast %11 : vector<128xf32> to vector<1x128xf32>
    %13 = vector.broadcast %12 : vector<1x128xf32> to vector<5x128xf32>
    %14 = arith.subf %10, %13 : vector<5x128xf32>
    %15 = math.exp %14 : vector<5x128xf32>
    %cst_4 = arith.constant dense<0.000000e+00> : vector<128xf32>
    %16 = vector.multi_reduction <add>, %15, %cst_4 [0] : vector<5x128xf32> to vector<128xf32>
    %17 = vector.shape_cast %16 : vector<128xf32> to vector<1x128xf32>
    %18 = math.log %17 : vector<1x128xf32>
    %19 = tpu.iota {dimensions = array<i32: 0>} : vector<5x128xi32>
    %20 = vector.broadcast %9 : vector<1x128xi32> to vector<5x128xi32>
    %21 = arith.cmpi eq, %19, %20 : vector<5x128xi32>
    %cst_5 = arith.constant 0.000000e+00 : f32
    %22 = vector.broadcast %cst_5 : f32 to vector<5x128xf32>
    %23 = arith.select %21, %14, %22 : vector<5x128xi1>, vector<5x128xf32>
    %cst_6 = arith.constant dense<0.000000e+00> : vector<128xf32>
    %24 = vector.multi_reduction <add>, %23, %cst_6 [0] : vector<5x128xf32> to vector<128xf32>
    %25 = vector.shape_cast %24 : vector<128xf32> to vector<1x128xf32>
    %c0_7 = arith.constant 0 : index
    %c0_8 = arith.constant 0 : index
    %26 = vector.load %arg6[%c0_7, %c0_8] : memref<1x128xf32, #tpu.memory_space<vmem>>, vector<1x128xf32>
    %27 = arith.subf %18, %25 : vector<1x128xf32>
    %cst_9 = arith.constant 0.000000e+00 : f32
    %28 = vector.broadcast %cst_9 : f32 to vector<1x128xf32>
    %29 = arith.select %8, %27, %28 : vector<1x128xi1>, vector<1x128xf32>
    %30 = arith.addf %26, %29 : vector<1x128xf32>
    %c0_10 = arith.constant 0 : index
    %c0_11 = arith.constant 0 : index
    %31 = vector.load %arg6[%c0_10, %c0_11] : memref<1x128xf32, #tpu.memory_space<vmem>>, vector<1x128xf32>
    tpu.vector_store %arg6[%c0_10, %c0_11], %30 {strides = array<i32>} : memref<1x128xf32, #tpu.memory_space<vmem>>, vector<1x128xf32>,
    %c0_12 = arith.constant 0 : index
    %c0_13 = arith.constant 0 : index
    %32 = vector.load %arg2[%c0_12, %c0_13] : memref<4x128xf32, #tpu.memory_space<vmem>>, vector<4x128xf32>
    %c0_14 = arith.constant 0 : index
    %c0_15 = arith.constant 0 : index
    %33 = vector.load %arg3[%c0_14, %c0_15] : memref<4x128xf32, #tpu.memory_space<vmem>>, vector<4x128xf32>
    %34 = arith.subf %32, %33 : vector<4x128xf32>
    %35 = math.absf %34 : vector<4x128xf32>
    %cst_16 = arith.constant 1.000000e+00 : f32
    %36 = vector.broadcast %cst_16 : f32 to vector<4x128xf32>
    %37 = arith.cmpf olt, %35, %36 : vector<4x128xf32>
    %cst_17 = arith.constant 5.000000e-01 : f32
    %38 = vector.broadcast %cst_17 : f32 to vector<4x128xf32>
    %39 = arith.mulf %38, %34 : vector<4x128xf32>
    %40 = arith.mulf %39, %34 : vector<4x128xf32>
    %cst_18 = arith.constant 5.000000e-01 : f32
    %41 = vector.broadcast %cst_18 : f32 to vector<4x128xf32>
    %42 = arith.subf %35, %41 : vector<4x128xf32>
    %43 = arith.select %37, %40, %42 : vector<4x128xi1>, vector<4x128xf32>
    %cst_19 = arith.constant dense<0.000000e+00> : vector<128xf32>
    %44 = vector.multi_reduction <add>, %43, %cst_19 [0] : vector<4x128xf32> to vector<128xf32>
    %45 = vector.shape_cast %44 : vector<128xf32> to vector<1x128xf32>
    %c0_i32_20 = arith.constant 0 : i32
    %46 = vector.broadcast %c0_i32_20 : i32 to vector<1x128xi32>
    %47 = arith.cmpi ne, %9, %46 : vector<1x128xi32>
    %48 = arith.andi %47, %8 : vector<1x128xi1>
    %c0_21 = arith.constant 0 : index
    %c0_22 = arith.constant 0 : index
    %49 = vector.load %arg7[%c0_21, %c0_22] : memref<1x128xf32, #tpu.memory_space<vmem>>, vector<1x128xf32>
    %cst_23 = arith.constant 0.000000e+00 : f32
    %50 = vector.broadcast %cst_23 : f32 to vector<1x128xf32>
    %51 = arith.select %48, %45, %50 : vector<1x128xi1>, vector<1x128xf32>
    %52 = arith.addf %49, %51 : vector<1x128xf32>
    %c0_24 = arith.constant 0 : index
    %c0_25 = arith.constant 0 : index
    %53 = vector.load %arg7[%c0_24, %c0_25] : memref<1x128xf32, #tpu.memory_space<vmem>>, vector<1x128xf32>
    tpu.vector_store %arg7[%c0_24, %c0_25], %52 {strides = array<i32>} : memref<1x128xf32, #tpu.memory_space<vmem>>, vector<1x128xf32>,
    %c0_26 = arith.constant 0 : index
    %c0_27 = arith.constant 0 : index
    %54 = vector.load %arg8[%c0_26, %c0_27] : memref<1x128xf32, #tpu.memory_space<vmem>>, vector<1x128xf32>
    %55 = arith.extui %48 : vector<1x128xi1> to vector<1x128xi32>
    %56 = arith.sitofp %55 : vector<1x128xi32> to vector<1x128xf32>
    %57 = arith.addf %54, %56 : vector<1x128xf32>
    %c0_28 = arith.constant 0 : index
    %c0_29 = arith.constant 0 : index
    %58 = vector.load %arg8[%c0_28, %c0_29] : memref<1x128xf32, #tpu.memory_space<vmem>>, vector<1x128xf32>
    tpu.vector_store %arg8[%c0_28, %c0_29], %57 {strides = array<i32>} : memref<1x128xf32, #tpu.memory_space<vmem>>, vector<1x128xf32>,
    %c0_i32_30 = arith.constant 0 : i32
    %59 = arith.cmpi eq, %arg0, %c0_i32_30 : i32
    %60 = arith.extui %59 : i1 to i32
    %c0_i32_31 = arith.constant 0 : i32
    %61 = arith.cmpi ne, %60, %c0_i32_31 : i32
    scf.if %61 {
      %c0_32 = arith.constant 0 : index
      %c0_33 = arith.constant 0 : index
      %62 = vector.load %arg6[%c0_32, %c0_33] : memref<1x128xf32, #tpu.memory_space<vmem>>, vector<1x128xf32>
      %cst_34 = arith.constant dense<0.000000e+00> : vector<1xf32>
      %63 = vector.multi_reduction <add>, %62, %cst_34 [1] : vector<1x128xf32> to vector<1xf32>
      %64 = vector.shape_cast %63 : vector<1xf32> to vector<1x1xf32>
      %c0_35 = arith.constant 0 : index
      %c0_36 = arith.constant 0 : index
      %65 = vector.load %arg7[%c0_35, %c0_36] : memref<1x128xf32, #tpu.memory_space<vmem>>, vector<1x128xf32>
      %cst_37 = arith.constant dense<0.000000e+00> : vector<1xf32>
      %66 = vector.multi_reduction <add>, %65, %cst_37 [1] : vector<1x128xf32> to vector<1xf32>
      %67 = vector.shape_cast %66 : vector<1xf32> to vector<1x1xf32>
      %c0_38 = arith.constant 0 : index
      %c0_39 = arith.constant 0 : index
      %68 = vector.load %arg8[%c0_38, %c0_39] : memref<1x128xf32, #tpu.memory_space<vmem>>, vector<1x128xf32>
      %cst_40 = arith.constant dense<0.000000e+00> : vector<1xf32>
      %69 = vector.multi_reduction <add>, %68, %cst_40 [1] : vector<1x128xf32> to vector<1xf32>
      %70 = vector.shape_cast %69 : vector<1xf32> to vector<1x1xf32>
      %cst_41 = arith.constant 1.250000e-01 : f32
      %71 = vector.broadcast %cst_41 : f32 to vector<1x1xf32>
      %72 = arith.mulf %64, %71 : vector<1x1xf32>
      %73 = arith.divf %67, %70 : vector<1x1xf32>
      %cst_42 = arith.constant 1.000000e+00 : f32
      %74 = vector.broadcast %cst_42 : f32 to vector<1x1xf32>
      %75 = arith.mulf %74, %73 : vector<1x1xf32>
      %76 = arith.addf %72, %75 : vector<1x1xf32>
      %c0_43 = arith.constant 0 : index
      %c0_44 = arith.constant 0 : index
      %77 = vector.load %arg5[%c0_43, %c0_44] : memref<1x1xf32, #tpu.memory_space<vmem>>, vector<1x1xf32>
      tpu.vector_store %arg5[%c0_43, %c0_44], %76 {strides = array<i32>} : memref<1x1xf32, #tpu.memory_space<vmem>>, vector<1x1xf32>,
    } else {
    }
    return
  }
  func.func @transform_0(%arg0: i32) -> (i32, i32) {
    %c0_i32 = arith.constant 0 : i32
    %c0_i32_0 = arith.constant 0 : i32
    return %c0_i32, %arg0 : i32, i32
  }
  func.func @transform_1(%arg0: i32) -> (i32, i32) {
    %c0_i32 = arith.constant 0 : i32
    %c0_i32_0 = arith.constant 0 : i32
    return %c0_i32, %arg0 : i32, i32
  }
  func.func @transform_2(%arg0: i32) -> (i32, i32) {
    %c0_i32 = arith.constant 0 : i32
    %c0_i32_0 = arith.constant 0 : i32
    return %c0_i32, %arg0 : i32, i32
  }
  func.func @transform_3(%arg0: i32) -> (i32, i32) {
    %c0_i32 = arith.constant 0 : i32
    %c0_i32_0 = arith.constant 0 : i32
    return %c0_i32, %arg0 : i32, i32
  }
  func.func @transform_4(%arg0: i32) -> (i32, i32) {
    %c0_i32 = arith.constant 0 : i32
    %c0_i32_0 = arith.constant 0 : i32
    %c0_i32_1 = arith.constant 0 : i32
    return %c0_i32, %c0_i32_0 : i32, i32
  }
}

</mosaic_0001>

<llo_original>
// kernel: tpu_custom_call.1
$region0: #{tpu_custom_call.1}
  #allocation0 [shape = 'u32[]', space=smem, size = 0x4, offset = 0x4, fixed_abs, tag = 'smem constant byte address 0x4 - core index']
  #allocation1 [shape = 'u32[72,128]{1,0:T(1,128)}', space=vmem, size = 0x9000, scoped, tag = 'internal scratch']
  #allocation2 [shape = 'f32[1,128]{1,0:T(1,128)}', space=vmem, size = 0x200, scoped, tag = 'scratch operand']
  #allocation3 [shape = 'f32[1,128]{1,0:T(1,128)}', space=vmem, size = 0x200, scoped, tag = 'scratch operand']
  #allocation4 [shape = 'f32[1,128]{1,0:T(1,128)}', space=vmem, size = 0x200, scoped, tag = 'scratch operand']
  %s0 = inlined_call_operand.hbm [shape: f32[5,8], index: 0, kind: input, shape index: {}]
  %s1 = inlined_call_operand.hbm [shape: f32[4,8], index: 1, kind: input, shape index: {}]
  %s2 = inlined_call_operand.hbm [shape: f32[4,8], index: 2, kind: input, shape index: {}]
  %s3 = inlined_call_operand.vmem [shape: s32[1,8], index: 3, kind: input, shape index: {}]
  %s4 = inlined_call_operand.hbm [shape: f32[1,1], index: 4, kind: output, shape index: {}]
  %s5 = sld [smem:[#allocation0]]
  $region46: #{tpu_custom_call.1} parent=0
    _
  %s7 = ssub.s32 1, %s5
  %s8 = scalar_select 0, %s7, %s5
  $region1: #{tpu_custom_call.1} parent=0
    #allocation5 [shape = 'u8[4096]{0}', space=vmem, size = 0x1000, scoped, tag = 'input window, operand 0, single buffered']
    #allocation6 [shape = 's32[1]{0}', space=sflag, size = 0x4, scoped, tag = 'scoped memory for tpu_custom_call.1']
    #allocation7 [shape = 's32[1]{0}', space=sflag, size = 0x4, scoped, tag = 'scoped memory for tpu_custom_call.1']
    #allocation8 [shape = 'u8[2048]{0}', space=vmem, size = 0x800, scoped, tag = 'input window, operand 1, single buffered']
    #allocation9 [shape = 's32[1]{0}', space=sflag, size = 0x4, scoped, tag = 'scoped memory for tpu_custom_call.1']
    #allocation10 [shape = 'u8[2048]{0}', space=vmem, size = 0x800, scoped, tag = 'input window, operand 2, single buffered']
    #allocation11 [shape = 'u8[512]{0}', space=vmem, size = 0x400, scoped, tag = 'output window, operand 0, single buffered']
    %9 = vsyncpa [#allocation6], 0
    %10 = vsyncpa [#allocation9], 0
    %11 = vsyncpa [#allocation7], 0
    // Predicated region
    $region2: #{tpu_custom_call.1} parent=1 // pred_check
      _
    $region3: #{tpu_custom_call.1} parent=1 // pred_check_branch
      %13 = sbr.rel (0) target = $region5
    $region4: #{tpu_custom_call.1} parent=1 // pred_region
      %15 = vsyncadd [#allocation6], 0
      %s17 = sshll.u32 %s0, 4
      %s18 = int_to_ptr.hbm [resolvable:$true] %s17
      %s19 = sshll.u32 [#allocation5], 4
      %s20 = int_to_ptr.vmem [resolvable:$true] %s19
      %22 = dma.hbm_to_vmem [thread:$0]  %s18, 128, %s20, [#allocation6]
    $region5: #{tpu_custom_call.1} parent=1 // pred_fallthru
      _
    // Predicated region
    $region6: #{tpu_custom_call.1} parent=1 // pred_check
      _
    $region7: #{tpu_custom_call.1} parent=1 // pred_check_branch
      %24 = sbr.rel (0) target = $region9
    $region8: #{tpu_custom_call.1} parent=1 // pred_region
      %26 = vsyncadd [#allocation9], 0
      %s28 = sshll.u32 %s1, 4
      %s29 = int_to_ptr.hbm [resolvable:$true] %s28
      %s30 = sshll.u32 [#allocation8], 4
      %s31 = int_to_ptr.vmem [resolvable:$true] %s30
      %33 = dma.hbm_to_vmem [thread:$0]  %s29, 64, %s31, [#allocation9]
    $region9: #{tpu_custom_call.1} parent=1 // pred_fallthru
      _
    // Predicated region
    $region10: #{tpu_custom_call.1} parent=1 // pred_check
      _
    $region11: #{tpu_custom_call.1} parent=1 // pred_check_branch
      %35 = sbr.rel (0) target = $region13
    $region12: #{tpu_custom_call.1} parent=1 // pred_region
      %37 = vsyncadd [#allocation9], 0
      %s39 = sshll.u32 %s2, 4
      %s40 = int_to_ptr.hbm [resolvable:$true] %s39
      %s41 = sshll.u32 [#allocation10], 4
      %s42 = int_to_ptr.vmem [resolvable:$true] %s41
      %44 = dma.hbm_to_vmem [thread:$0]  %s40, 64, %s42, [#allocation9]
    $region13: #{tpu_custom_call.1} parent=1 // pred_fallthru
      _
    // Predicated region
    $region14: #{tpu_custom_call.1} parent=1 // pred_check
      _
    $region15: #{tpu_custom_call.1} parent=1 // pred_check_branch
      %46 = sbr.rel (0) target = $region17
    $region16: #{tpu_custom_call.1} parent=1 // pred_region
      _
    $region17: #{tpu_custom_call.1} parent=1 // pred_fallthru
      _
    // Predicated region
    $region18: #{tpu_custom_call.1} parent=1 // pred_check
      _
    $region19: #{tpu_custom_call.1} parent=1 // pred_check_branch
      %48 = sbr.rel (0) target = $region21
    $region20: #{tpu_custom_call.1} parent=1 // pred_region
      %50 = dma.done [#allocation6], 128
    $region21: #{tpu_custom_call.1} parent=1 // pred_fallthru
      _
    // Predicated region
    $region22: #{tpu_custom_call.1} parent=1 // pred_check
      _
    $region23: #{tpu_custom_call.1} parent=1 // pred_check_branch
      %52 = sbr.rel (0) target = $region25
    $region24: #{tpu_custom_call.1} parent=1 // pred_region
      %54 = dma.done [#allocation9], 64
    $region25: #{tpu_custom_call.1} parent=1 // pred_fallthru
      _
    // Predicated region
    $region26: #{tpu_custom_call.1} parent=1 // pred_check
      _
    $region27: #{tpu_custom_call.1} parent=1 // pred_check_branch
      %56 = sbr.rel (0) target = $region29
    $region28: #{tpu_custom_call.1} parent=1 // pred_region
      %58 = dma.done [#allocation9], 64
    $region29: #{tpu_custom_call.1} parent=1 // pred_fallthru
      _
    %p59 = scmp.eq.s32.totalorder 0, 0
    // Predicated region
    $region30: #{tpu_custom_call.1} parent=1 // pred_check
      %p60 = pneg %p59
    $region31: #{tpu_custom_call.1} parent=1 // pred_check_branch
      %62 = sbr.rel (%p60) target = $region33
    $region32: #{tpu_custom_call.1} parent=1 // pred_region
      %63 = vst [vmem:[#allocation2] sm:$0x1] 0.0
      %64 = vst [vmem:[#allocation3] sm:$0x1] 0.0
      %65 = vst [vmem:[#allocation4] sm:$0x1] 0.0
    $region33: #{tpu_custom_call.1} parent=1 // pred_fallthru
      _
    %v66 = vlaneseq
    %v67 = vand.u32 %v66, 127
    %s68 = smul.u32 0, 128
    %v69 = vstv %s68
    %v70 = vadd.s32 %v69, %v67
    %vm71 = vcmp.lt.s32.totalorder %v70, 8
    %v72 = vld [vmem:[%s3] sm:$0x1]
    %v73 = vld [vmem:[#allocation5] sm:$0x1f]
    %vm74 = vcmask 1044480
    %v75 = vsel %vm74, %v73, -inf
    %v76 = vrot.slane %v75, 4
    %v77 = vmax.f32 %v75, %v76
    %v78 = vrot.slane %v77, 2
    %v79 = vmax.f32 %v77, %v78
    %v80 = vrot.slane %v79, 1
    %v81 = vmax.f32 %v79, %v80
    %v82 = vsub.f32 %v73, %v81
    %v83 = vmul.f32 %v82, 1.442695
    %v84 = vpow.pop %v83
    %v85 = vsel %vm74, %v84, 0.0
    %v86 = vrot.slane %v85, 4
    %v87 = vadd.f32 %v85, %v86
    %v88 = vrot.slane %v87, 2
    %v89 = vadd.f32 %v87, %v88
    %v90 = vrot.slane %v89, 1
    %v91 = vadd.f32 %v89, %v90
    %v92 = vlog2.pop %v91
    %v93 = vmul.f32 %v92, 0.6931472
    %v94 = vlaneseq
    %v95 = vshrl.u32 %v94, 7
    %v96 = vperm.slane %v72, 0
    %vm97 = vcmp.eq.s32.totalorder %v95, %v96
    %v98 = vsel %vm97, %v82, 0.0
    %v99 = vsel %vm74, %v98, 0.0
    %v100 = vrot.slane %v99, 4
    %v101 = vadd.f32 %v99, %v100
    %v102 = vrot.slane %v101, 2
    %v103 = vadd.f32 %v101, %v102
    %v104 = vrot.slane %v103, 1
    %v105 = vadd.f32 %v103, %v104
    %v106 = vld [vmem:[#allocation2] sm:$0x1]
    %v107 = vsub.f32 %v93, %v105
    %v108 = vsel %vm71, %v107, 0.0
    %v109 = vadd.f32 %v106, %v108
    %110 = vst [vmem:[#allocation2] sm:$0x1] %v109
    %v111 = vld [vmem:[#allocation8] sm:$0xf]
    %v112 = vld [vmem:[#allocation10] sm:$0xf]
    %v113 = vsub.f32 %v111, %v112
    %v114 = vand.u32 2147483647, %v113
    %vm115 = vcmp.lt.f32.partialorder %v114, 1.0
    %v116 = vmul.f32 %v113, 0.5
    %v117 = vmul.f32 %v116, %v113
    %v118 = vsub.f32 %v114, 0.5
    %v119 = vsel %vm115, %v117, %v118
    %vm120 = vcmask 1043456
    %v121 = vsel %vm120, %v119, 0.0
    %v122 = vrot.slane %v121, 4
    %v123 = vadd.f32 %v121, %v122
    %v124 = vrot.slane %v123, 2
    %v125 = vadd.f32 %v123, %v124
    %v126 = vrot.slane %v125, 1
    %v127 = vadd.f32 %v125, %v126
    %vm128 = vcmp.ne.s32.totalorder %v72, 0
    %vm129 = vmand %vm128, %vm71
    %v130 = vld [vmem:[#allocation3] sm:$0x1]
    %v131 = vsel %vm129, %v127, 0.0
    %v132 = vadd.f32 %v130, %v131
    %133 = vst [vmem:[#allocation3] sm:$0x1] %v132
    %v134 = vld [vmem:[#allocation4] sm:$0x1]
    %v135 = vsel %vm129, 1, 0
    %v136 = vcvt.s32.f32 %v135
    %v137 = vadd.f32 %v134, %v136
    %138 = vst [vmem:[#allocation4] sm:$0x1] %v137
    // Predicated region
    $region34: #{tpu_custom_call.1} parent=1 // pred_check
      %p139 = pneg %p59
    $region35: #{tpu_custom_call.1} parent=1 // pred_check_branch
      %141 = sbr.rel (%p139) target = $region37
    $region36: #{tpu_custom_call.1} parent=1 // pred_region
      %v142 = vld [vmem:[#allocation2] sm:$0x1]
      %vm143 = vcmask 1040384
      %v144 = vsel %vm143, %v142, 0.0
      %145 = vadd.xlane.f32.xlu0 %v144
      %v146 = vpop.xlane.xlu0 %145
      %v147 = vld [vmem:[#allocation3] sm:$0x1]
      %v148 = vsel %vm143, %v147, 0.0
      %149 = vadd.xlane.f32.xlu0 %v148
      %v150 = vpop.xlane.xlu0 %149
      %v151 = vld [vmem:[#allocation4] sm:$0x1]
      %v152 = vsel %vm143, %v151, 0.0
      %153 = vadd.xlane.f32.xlu0 %v152
      %v154 = vpop.xlane.xlu0 %153
      %v155 = vmul.f32 %v146, 0.125
      %v156 = vrcp.pop %v154
      %v157 = vmul.f32 %v154, %v156
      %v158 = vsub.f32 1.0, %v157
      %v159 = vmul.f32 %v156, %v158
      %v160 = vadd.f32 %v156, %v159
      %vm161 = vweird.f32 %v154
      %vm162 = vweird.f32 %v156
      %vm163 = vmor %vm161, %vm162
      %v164 = vsel %vm163, %v156, %v160
      %v165 = vand.u32 2147483647, %v154
      %vm166 = vcmp.eq.f32.partialorder %v165, 8.507059e+37
      %v167 = vand.u32 %v154, 2147483648
      %v168 = vor.u32 1.1754944e-38, %v167
      %v169 = vsel %vm166, %v168, %v164
      %v170 = vmul.f32 %v150, %v169
      %v171 = vadd.f32 %v155, %v170
      %vm172 = vcmask 0
      %173 = vst.msk [vmem:[#allocation11] sm:$0x1] %vm172, %v171
    $region37: #{tpu_custom_call.1} parent=1 // pred_fallthru
      _
    // Predicated region
    $region38: #{tpu_custom_call.1} parent=1 // pred_check
      _
    $region39: #{tpu_custom_call.1} parent=1 // pred_check_branch
      %175 = sbr.rel (0) target = $region41
    $region40: #{tpu_custom_call.1} parent=1 // pred_region
      %177 = vsyncadd [#allocation7], 0
      %s179 = sshll.u32 [#allocation11], 4
      %s180 = int_to_ptr.vmem [resolvable:$true] %s179
      %s181 = sshll.u32 %s4, 4
      %s182 = int_to_ptr.hbm [resolvable:$true] %s181
      %184 = dma.vmem_to_hbm [thread:$0]  %s180, 16, %s182, [#allocation7]
    $region41: #{tpu_custom_call.1} parent=1 // pred_fallthru
      _
    // Predicated region
    $region42: #{tpu_custom_call.1} parent=1 // pred_check
      _
    $region43: #{tpu_custom_call.1} parent=1 // pred_check_branch
      %186 = sbr.rel (0) target = $region45
    $region44: #{tpu_custom_call.1} parent=1 // pred_region
      %188 = dma.done [#allocation7], 16
    $region45: #{tpu_custom_call.1} parent=1 // pred_fallthru
      _
    %189 = vsyncpa [#allocation6], 1
    %190 = vsyncpa [#allocation9], 1
    %191 = vsyncpa [#allocation7], 1

</llo_original>
